<compile_context>
chip_gen: v7x
topology: tpu7x:2x2x1
jax: 0.10.0
libtpu: 0.0.40
codegen_flags: <defaults>
</compile_context>

<pallas_src>
import functools
import math

import numpy as np

import jax
import jax.numpy as jnp
from jax.experimental import pallas as pl
from jax.experimental.pallas import tpu as pltpu

# ----------------------------- config (small, consistent with the module) ----
IN_CHANS = 3
DIMS = [8, 16, 32, 64]          # dims[i] per stage (small stand-ins for [96,192,384,768])
DEPTHS = [1, 1, 1, 1]           # blocks per stage (small stand-ins for [3,3,9,3])
B = 2
P_MASK = 2                      # mask is (B, P_MASK**2); upsampled by 2**(4-1)=8
H_IN = W_IN = 32 * P_MASK       # 64 ; stem /4 -> 16 == P_MASK*8 so mask matches
LANES = 128                     # every stage has W*C == 128 (lane-dense invariant)


# ----------------------------- in-kernel helpers ------------------------------
def _group_sum_lanes(v, group):
    """Exact sum over each contiguous `group`-lane block, broadcast to every lane.

    Uses lane rotations (XLU) + selects instead of a relayout reshape, so `v`
    stays in its dense (rows, 128) layout.  f32 adds -> exact LN statistics.
    """
    nlanes = v.shape[-1]
    if group == 1:
        return v
    lane = jax.lax.broadcasted_iota(jnp.int32, (1, nlanes), 1)
    within = lane % group
    s = v
    step = 1
    while step < group:
        hi = pltpu.roll(s, (-step) % nlanes, axis=1)      # s[l + step]   (same block)
        lo = pltpu.roll(s, group - step, axis=1)          # s[l + step - group]
        s = s + jnp.where(within < group - step, hi, lo)
        step *= 2
    return s


def _gelu_exact(x):
    # PyTorch nn.GELU() default is the exact (erf) form.  Abramowitz & Stegun
    # 7.1.26 rational approximation; exp + reciprocal land on the EUP slot.
    # TODO(synk): polynomial erf (no native erf primitive); matches exact GELU to
    # ~f32 precision, with pl.reciprocal(approx=True) adding a last-ulp-level error.
    a1, a2, a3, a4, a5 = 0.254829592, -0.284496736, 1.421413741, -1.453152027, 1.061405429
    p = 0.3275911
    xs = x * 0.7071067811865476
    sgn = jnp.where(xs >= 0.0, 1.0, -1.0)
    ax = jnp.abs(xs)
    t = pl.reciprocal(1.0 + p * ax, approx=True)          # EUP
    poly = ((((a5 * t + a4) * t + a3) * t + a2) * t + a1) * t
    erf = sgn * (1.0 - poly * jnp.exp(-ax * ax))          # exp on EUP
    return 0.5 * x * (1.0 + erf)


# ----------------------------- Pallas kernels --------------------------------
def _stem_kernel(C0, p_ref, m_ref, w_ref, b_ref, lnw_ref, lnb_ref, o_ref):
    """Fused stem: 4x4/s4 conv (block-diag matmul) + channels_first LN + (1-mask)."""
    y = jnp.dot(p_ref[0], w_ref[...], preferred_element_type=jnp.float32) + b_ref[...]
    gs = _group_sum_lanes(y, C0)                          # per-token (per-w) stats
    mean = gs * (1.0 / C0)
    yc = y - mean
    var = _group_sum_lanes(yc * yc, C0) * (1.0 / C0)
    y = yc * jax.lax.rsqrt(var + 1e-6) * lnw_ref[...] + lnb_ref[...]
    o_ref[0] = (y * (1.0 - m_ref[0])).astype(o_ref.dtype)


def _down_kernel(Cp, x_ref, lnw_ref, lnb_ref, se_ref, so_ref, a0_ref, a1_ref,
                 b_ref, o_ref):
    """Fused downsample: channels_first LN + 2x2 stride-2 conv, lane-dense in/out."""
    x = x_ref[0]                                          # (Hp, 128) f32
    gs = _group_sum_lanes(x, Cp)
    mean = gs * (1.0 / Cp)
    xc = x - mean
    var = _group_sum_lanes(xc * xc, Cp) * (1.0 / Cp)
    t = (xc * jax.lax.rsqrt(var + 1e-6) * lnw_ref[...] + lnb_ref[...]).astype(jnp.bfloat16)
    # even / odd input rows (kernel-row a = 0 / 1), via exact 0/1 selection matmuls
    te = jnp.dot(se_ref[...], t, preferred_element_type=jnp.float32).astype(jnp.bfloat16)
    to = jnp.dot(so_ref[...], t, preferred_element_type=jnp.float32).astype(jnp.bfloat16)
    y = (jnp.dot(te, a0_ref[...], preferred_element_type=jnp.float32)
         + jnp.dot(to, a1_ref[...], preferred_element_type=jnp.float32)
         + b_ref[...])
    o_ref[0] = y.astype(o_ref.dtype)


def _block_kernel(H, W, C, x_ref, tapw_ref, dwb_ref, lnw_ref, lnb_ref,
                  w1_ref, b1_ref, gg_ref, gb_ref, w2_ref, b2_ref, o_ref, xp_ref):
    """One fused ConvNeXtV2 block per image, fully lane-dense (last dim 128/512)."""
    C4W = 4 * C * W                                       # == 512 at every stage
    x = x_ref[0]                                          # (H, 128) f32, lane = w*C + c

    # 3-row halo in VMEM scratch (no HBM pad array, no duplicate x/xpad input)
    xp_ref[...] = jnp.zeros((H + 6, LANES), jnp.float32)
    xp_ref[3:3 + H, :] = x

    # depthwise 7x7, padding=3: W-shifts as lane rolls (XLU), validity folded into
    # the precomputed tap weights; 4 independent accumulators fill the VALU slots.
    tapw = tapw_ref[...]                                  # (49, 128) hoisted load
    acc = [jnp.zeros((H, LANES), jnp.float32) for _ in range(4)]
    for i in range(7):
        ri = xp_ref[i:i + H, :]                           # rows x[h + i - 3]
        for j in range(7):
            k = i * 7 + j
            d = j - 3
            sh = ri if d == 0 else pltpu.roll(ri, (-d * C) % LANES, axis=1)
            acc[k % 4] = acc[k % 4] + sh * tapw[k]
    dw = (acc[0] + acc[1]) + (acc[2] + acc[3]) + dwb_ref[...]

    # LayerNorm over channels (channels_last, eps=1e-6), per token, exact f32 stats
    gs = _group_sum_lanes(dw, C)
    mean = gs * (1.0 / C)
    xc = dw - mean
    var = _group_sum_lanes(xc * xc, C) * (1.0 / C)
    t = xc * jax.lax.rsqrt(var + 1e-6) * lnw_ref[...] + lnb_ref[...]

    # pwconv1 (block-diagonal weight, bf16 in / f32 acc) + exact GELU
    h = jnp.dot(t.astype(jnp.bfloat16), w1_ref[...],
                preferred_element_type=jnp.float32) + b1_ref[...]
    h = _gelu_exact(h)                                    # (H, 512) fully lane-dense

    # GRN: per-channel spatial L2 norm; channel groups sit at lane stride 4C, so
    # the group sum is an exact rotation butterfly (log2(W) rolls).
    g = jnp.sum(h * h, axis=0, keepdims=True)             # (1, 512)
    shift = 4 * C
    while shift < C4W:
        g = g + pltpu.roll(g, shift, axis=1)
        shift *= 2
    gx = jnp.sqrt(g)
    gmean = jnp.sum(gx, axis=1, keepdims=True) * (1.0 / C4W)
    nx = gx * pl.reciprocal(gmean + 1e-6, approx=True)
    h = gg_ref[...] * (h * nx) + gb_ref[...] + h

    # pwconv2 + residual (drop_path rate = 0 -> identity); lane-dense 128-wide store
    y = jnp.dot(h.astype(jnp.bfloat16), w2_ref[...],
                preferred_element_type=jnp.float32) + b2_ref[...]
    o_ref[0] = (y + x).astype(o_ref.dtype)


# ----------------------------- parameter packing (XLA glue, tiny) -------------
def pack_stem(params, Wo, C0):
    assert Wo * C0 == LANES
    wbd = jnp.kron(jnp.eye(Wo, dtype=jnp.float32), params["stem_w"])   # (Wo*48, 128)
    return dict(
        w=wbd.astype(jnp.bfloat16),
        b=jnp.tile(params["stem_b"].reshape(1, C0), (1, Wo)),
        lnw=jnp.tile(params["stem_ln_w"].reshape(1, C0), (1, Wo)),
        lnb=jnp.tile(params["stem_ln_b"].reshape(1, C0), (1, Wo)))


def pack_down(d, Hp, Wp, Cp):
    """LN params lane-tiled + 2x2 conv as two (128,128) block matrices A0/A1."""
    Ci = d["w"].shape[1]
    Hi, Wi = Hp // 2, Wp // 2
    assert Wp * Cp == LANES and Wi * Ci == LANES
    A = []
    for a in range(2):
        Aa = jnp.zeros((LANES, LANES), jnp.float32)
        for b in range(2):
            P = np.zeros((Wp, Wi), np.float32)
            P[2 * np.arange(Wi) + b, np.arange(Wi)] = 1.0
            Wab = d["w"][(2 * a + b) * Cp:(2 * a + b + 1) * Cp, :]      # (Cp, Ci)
            Aa = Aa + jnp.kron(jnp.asarray(P), Wab)
        A.append(Aa.astype(jnp.bfloat16))
    Se = np.zeros((Hi, Hp), np.float32); Se[np.arange(Hi), 2 * np.arange(Hi)] = 1.0
    So = np.zeros((Hi, Hp), np.float32); So[np.arange(Hi), 2 * np.arange(Hi) + 1] = 1.0
    return dict(
        lnw=jnp.tile(d["ln_w"].reshape(1, Cp), (1, Wp)),
        lnb=jnp.tile(d["ln_b"].reshape(1, Cp), (1, Wp)),
        Se=jnp.asarray(Se, jnp.bfloat16), So=jnp.asarray(So, jnp.bfloat16),
        A0=A[0], A1=A[1],
        b=jnp.tile(d["b"].reshape(1, Ci), (1, Wi)))


def pack_block(p, W, C):
    """Lane-tile per-channel params; fold W-boundary validity into dw tap weights;
    expand pointwise conv weights to block-diagonal (kron) lane-dense form."""
    assert W * C == LANES
    C4 = 4 * C
    lane = np.arange(LANES)
    wpos, ch = lane // C, lane % C
    valid = np.zeros((49, LANES), np.float32)
    for k in range(49):
        d = (k % 7) - 3
        valid[k] = ((wpos + d >= 0) & (wpos + d < W)).astype(np.float32)
    tapw = p["dww"][:, ch] * jnp.asarray(valid)                         # (49, 128)
    eyeW = jnp.eye(W, dtype=jnp.float32)
    return dict(
        tapw=tapw.astype(jnp.float32),
        dwb=jnp.tile(p["dwb"].reshape(1, C), (1, W)),
        lnw=jnp.tile(p["ln_w"].reshape(1, C), (1, W)),
        lnb=jnp.tile(p["ln_b"].reshape(1, C), (1, W)),
        w1=jnp.kron(eyeW, p["w1"]).astype(jnp.bfloat16),                # (128, 512)
        b1=jnp.tile(p["b1"].reshape(1, C4), (1, W)),
        gg=jnp.tile(p["gg"].reshape(1, C4), (1, W)),
        gb=jnp.tile(p["gb"].reshape(1, C4), (1, W)),
        w2=jnp.kron(eyeW, p["w2"]).astype(jnp.bfloat16),                # (512, 128)
        b2=jnp.tile(p["b2"].reshape(1, C), (1, W)))


# ----------------------------- Pallas wrappers --------------------------------
_PAR = pltpu.CompilerParams(dimension_semantics=("parallel",))


def stem_apply(patches, mask_lane, sp, C0):
    Bn, Ho, Kp = patches.shape
    full2 = lambda b: (0, 0)
    img3 = lambda b: (b, 0, 0)
    return pl.pallas_call(
        functools.partial(_stem_kernel, C0),
        out_shape=jax.ShapeDtypeStruct((Bn, Ho, LANES), jnp.float32),
        grid=(Bn,),
        in_specs=[pl.BlockSpec((1, Ho, Kp), img3),
                  pl.BlockSpec((1, Ho, LANES), img3),
                  pl.BlockSpec((Kp, LANES), full2),
                  pl.BlockSpec((1, LANES), full2),
                  pl.BlockSpec((1, LANES), full2),
                  pl.BlockSpec((1, LANES), full2)],
        out_specs=pl.BlockSpec((1, Ho, LANES), img3),
        compiler_params=_PAR,
    )(patches, mask_lane, sp["w"], sp["b"], sp["lnw"], sp["lnb"])


def down_apply(x, dp, Hp, Cp):
    Bn = x.shape[0]
    Hi = Hp // 2
    full2 = lambda b: (0, 0)
    return pl.pallas_call(
        functools.partial(_down_kernel, Cp),
        out_shape=jax.ShapeDtypeStruct((Bn, Hi, LANES), jnp.float32),
        grid=(Bn,),
        in_specs=[pl.BlockSpec((1, Hp, LANES), lambda b: (b, 0, 0)),
                  pl.BlockSpec((1, LANES), full2),
                  pl.BlockSpec((1, LANES), full2),
                  pl.BlockSpec((Hi, Hp), full2),
                  pl.BlockSpec((Hi, Hp), full2),
                  pl.BlockSpec((LANES, LANES), full2),
                  pl.BlockSpec((LANES, LANES), full2),
                  pl.BlockSpec((1, LANES), full2)],
        out_specs=pl.BlockSpec((1, Hi, LANES), lambda b: (b, 0, 0)),
        compiler_params=_PAR,
    )(x, dp["lnw"], dp["lnb"], dp["Se"], dp["So"], dp["A0"], dp["A1"], dp["b"])


def block_apply(x, bp, H, W, C):
    Bn = x.shape[0]
    img3 = lambda b: (b, 0, 0)
    full2 = lambda b: (0, 0)
    return pl.pallas_call(
        functools.partial(_block_kernel, H, W, C),
        out_shape=jax.ShapeDtypeStruct((Bn, H, LANES), jnp.float32),
        grid=(Bn,),
        in_specs=[pl.BlockSpec((1, H, LANES), img3),
                  pl.BlockSpec((49, LANES), full2),
                  pl.BlockSpec((1, LANES), full2),
                  pl.BlockSpec((1, LANES), full2),
                  pl.BlockSpec((1, LANES), full2),
                  pl.BlockSpec((LANES, 4 * LANES), full2),
                  pl.BlockSpec((1, 4 * LANES), full2),
                  pl.BlockSpec((1, 4 * LANES), full2),
                  pl.BlockSpec((1, 4 * LANES), full2),
                  pl.BlockSpec((4 * LANES, LANES), full2),
                  pl.BlockSpec((1, LANES), full2)],
        out_specs=pl.BlockSpec((1, H, LANES), img3),
        scratch_shapes=[pltpu.VMEM((H + 6, LANES), jnp.float32)],
        compiler_params=_PAR,
    )(x, bp["tapw"], bp["dwb"], bp["lnw"], bp["lnb"], bp["w1"], bp["b1"],
      bp["gg"], bp["gb"], bp["w2"], bp["b2"])


# ----------------------------- parameters -------------------------------------
def init_params(key):
    keys = iter(jax.random.split(key, 128))
    nrm = lambda k, shape, s=0.02: jax.random.normal(k, shape, jnp.float32) * s
    params = {
        "stem_w": nrm(next(keys), (4 * 4 * IN_CHANS, DIMS[0])),
        "stem_b": jnp.zeros((DIMS[0],), jnp.float32),
        "stem_ln_w": jnp.ones((DIMS[0],), jnp.float32),
        "stem_ln_b": jnp.zeros((DIMS[0],), jnp.float32),
        "down": [],
        "stages": [],
    }
    for i in range(3):
        params["down"].append(dict(
            ln_w=jnp.ones((DIMS[i],), jnp.float32),
            ln_b=jnp.zeros((DIMS[i],), jnp.float32),
            w=nrm(next(keys), (2 * 2 * DIMS[i], DIMS[i + 1])),
            b=jnp.zeros((DIMS[i + 1],), jnp.float32)))
    for i in range(4):
        C = DIMS[i]
        blocks = []
        for _ in range(DEPTHS[i]):
            blocks.append(dict(
                dww=nrm(next(keys), (49, C), 0.1),
                dwb=jnp.zeros((C,), jnp.float32),
                ln_w=jnp.ones((C,), jnp.float32),
                ln_b=jnp.zeros((C,), jnp.float32),
                w1=nrm(next(keys), (C, 4 * C)),
                b1=jnp.zeros((4 * C,), jnp.float32),
                # PyTorch GRN inits gamma/beta to zero (making GRN a no-op);
                # small random values used here so the GRN path is exercised.
                gg=nrm(next(keys), (4 * C,)),
                gb=nrm(next(keys), (4 * C,)),
                w2=nrm(next(keys), (4 * C, C)),
                b2=jnp.zeros((C,), jnp.float32)))
        params["stages"].append(blocks)
    return params


# ----------------------------- forward -----------------------------------------
def sparse_convnextv2_forward(params, x_nchw, mask):
    Bn = x_nchw.shape[0]
    x = jnp.transpose(x_nchw, (0, 2, 3, 1)).astype(jnp.float32)       # NCHW -> NHWC
    H0, W0, C0 = H_IN // 4, W_IN // 4, DIMS[0]

    # stem patchify (tiny XLA glue on the raw image) -> (B, H0, W0*16*Cin)
    # TODO(synk): patch extraction for the stem/downsample stays in XLA glue; at
    # these toy sizes it is negligible and avoids an in-kernel transpose.
    patches = (x.reshape(Bn, H0, 4, W0, 4, IN_CHANS)
                 .transpose(0, 1, 3, 2, 4, 5)
                 .reshape(Bn, H0, W0 * 4 * 4 * IN_CHANS)).astype(jnp.bfloat16)

    # upsample_mask: (B, L) -> (B, H0, W0), then lane-expanded to (B, H0, 128)
    scale = 2 ** (len(DEPTHS) - 1)
    p_side = int(math.isqrt(mask.shape[1]))
    m = mask.reshape(Bn, p_side, p_side).astype(jnp.float32)
    m = jnp.repeat(jnp.repeat(m, scale, axis=1), scale, axis=2)
    m_lane = jnp.repeat(m, C0, axis=-1)

    # fused stem: conv4x4/s4 + channels_first LN + (1 - mask)
    xl = stem_apply(patches, m_lane, pack_stem(params, W0, C0), C0)    # (B, H0, 128)

    H, W, C = H0, W0, C0
    for i in range(4):
        if i > 0:
            dp = pack_down(params["down"][i - 1], H, W, C)
            xl = down_apply(xl, dp, H, C)
            H, W, C = H // 2, W // 2, DIMS[i]
        for blk in params["stages"][i]:
            xl = block_apply(xl, pack_block(blk, W, C), H, W, C)

    # lane-dense (B, H, W*C) -> NCHW to match the PyTorch module's output
    return jnp.transpose(xl.reshape(Bn, H, W, C), (0, 3, 1, 2))


# ----------------------------- main -------------------------------------------
if __name__ == "__main__":
    key = jax.random.PRNGKey(0)
    k_param, k_x, k_m = jax.random.split(key, 3)

    params = init_params(k_param)
    x = jax.random.normal(k_x, (B, IN_CHANS, H_IN, W_IN), jnp.float32)
    mask = (jax.random.uniform(k_m, (B, P_MASK * P_MASK)) > 0.5).astype(jnp.float32)

    out = sparse_convnextv2_forward(params, x, mask)
    out = jax.block_until_ready(out)
    assert out.shape == (B, DIMS[-1], H_IN // 32, W_IN // 32)
    print("KERNEL_OK")
</pallas_src>

<mosaic_0001>
module attributes {stable_mosaic.version = 11 : i64} {
  func.func @_stem_kernel(%arg0: i32, %arg1: memref<1x16x768xbf16, #tpu.memory_space<vmem>>, %arg2: memref<1x16x128xf32, #tpu.memory_space<vmem>>, %arg3: memref<768x128xbf16, #tpu.memory_space<vmem>>, %arg4: memref<1x128xf32, #tpu.memory_space<vmem>>, %arg5: memref<1x128xf32, #tpu.memory_space<vmem>>, %arg6: memref<1x128xf32, #tpu.memory_space<vmem>>, %arg7: memref<1x16x128xf32, #tpu.memory_space<vmem>>) attributes {dimension_semantics = [#tpu.dimension_semantics<parallel>], iteration_bounds = array<i64: 2>, scalar_prefetch = 0 : i64, scratch_operands = 0 : i64, tpu.core_type = #tpu.core_type<tc>, window_params = [{transform_indices = @transform_0, window_bounds = array<i64: 1, 16, 768>}, {transform_indices = @transform_1, window_bounds = array<i64: 1, 16, 128>}, {pipeline_mode = #tpu.pipeline_mode<synchronous>, transform_indices = @transform_2, window_bounds = array<i64: 768, 128>}, {pipeline_mode = #tpu.pipeline_mode<synchronous>, transform_indices = @transform_3, window_bounds = array<i64: 1, 128>}, {pipeline_mode = #tpu.pipeline_mode<synchronous>, transform_indices = @transform_4, window_bounds = array<i64: 1, 128>}, {pipeline_mode = #tpu.pipeline_mode<synchronous>, transform_indices = @transform_5, window_bounds = array<i64: 1, 128>}, {transform_indices = @transform_6, window_bounds = array<i64: 1, 16, 128>}]} {
    %c0 = arith.constant 0 : index
    %c0_0 = arith.constant 0 : index
    %c0_1 = arith.constant 0 : index
    %0 = vector.load %arg1[%c0, %c0_0, %c0_1] : memref<1x16x768xbf16, #tpu.memory_space<vmem>>, vector<1x16x768xbf16>
    %1 = vector.shape_cast %0 : vector<1x16x768xbf16> to vector<16x768xbf16>
    %c0_2 = arith.constant 0 : index
    %c0_3 = arith.constant 0 : index
    %2 = vector.load %arg3[%c0_2, %c0_3] : memref<768x128xbf16, #tpu.memory_space<vmem>>, vector<768x128xbf16>
    %cst = arith.constant dense<0.000000e+00> : vector<16x128xf32>
    %3 = tpu.matmul %1, %2, %cst {dimension_numbers = #tpu.dot_dimension_numbers<[1], [0], [0], [1], [0, 0, 1, 1], [], []>} : vector<16x768xbf16>, vector<768x128xbf16>, vector<16x128xf32> -> vector<16x128xf32>
    %c0_4 = arith.constant 0 : index
    %c0_5 = arith.constant 0 : index
    %4 = vector.load %arg4[%c0_4, %c0_5] : memref<1x128xf32, #tpu.memory_space<vmem>>, vector<1x128xf32>
    %5 = vector.broadcast %4 : vector<1x128xf32> to vector<16x128xf32>
    %6 = arith.addf %3, %5 : vector<16x128xf32>
    %7 = tpu.iota {dimensions = array<i32: 1>} : vector<1x128xi32>
    %c8_i32 = arith.constant 8 : i32
    %c0_i32 = arith.constant 0 : i32
    %8 = arith.cmpi eq, %c8_i32, %c0_i32 : i32
    %c1_i32 = arith.constant 1 : i32
    %9 = arith.select %8, %c1_i32, %c8_i32 : i32
    %10 = vector.broadcast %9 : i32 to vector<1x128xi32>
    %11 = arith.remsi %7, %10 : vector<1x128xi32>
    %c0_i32_6 = arith.constant 0 : i32
    %12 = vector.broadcast %c0_i32_6 : i32 to vector<1x128xi32>
    %13 = arith.cmpi ne, %11, %12 : vector<1x128xi32>
    %c0_i32_7 = arith.constant 0 : i32
    %14 = vector.broadcast %c0_i32_7 : i32 to vector<1x128xi32>
    %15 = arith.cmpi slt, %11, %14 : vector<1x128xi32>
    %c0_i32_8 = arith.constant 0 : i32
    %16 = arith.cmpi slt, %9, %c0_i32_8 : i32
    %17 = vector.broadcast %16 : i1 to vector<1x128xi1>
    %18 = vector.broadcast %17 : vector<1x128xi1> to vector<1x128xi1>
    %19 = arith.xori %15, %18 : vector<1x128xi1>
    %20 = arith.andi %19, %13 : vector<1x128xi1>
    %21 = vector.broadcast %9 : i32 to vector<1x128xi32>
    %22 = arith.addi %11, %21 : vector<1x128xi32>
    %23 = arith.select %20, %22, %11 : vector<1x128xi1>, vector<1x128xi32>
    %c127_i32 = arith.constant 127 : i32
    %24 = tpu.dynamic_rotate %6 by %c127_i32 dim 1 : vector<16x128xf32>, i32 -> vector<16x128xf32>
    %c7_i32 = arith.constant 7 : i32
    %25 = tpu.dynamic_rotate %6 by %c7_i32 dim 1 : vector<16x128xf32>, i32 -> vector<16x128xf32>
    %c7_i32_9 = arith.constant 7 : i32
    %26 = vector.broadcast %c7_i32_9 : i32 to vector<1x128xi32>
    %27 = arith.cmpi slt, %23, %26 : vector<1x128xi32>
    %28 = vector.shape_cast %27 : vector<1x128xi1> to vector<1x128xi1>
    %29 = vector.broadcast %28 : vector<1x128xi1> to vector<16x128xi1>
    %30 = arith.select %29, %24, %25 : vector<16x128xi1>, vector<16x128xf32>
    %31 = arith.addf %6, %30 : vector<16x128xf32>
    %c126_i32 = arith.constant 126 : i32
    %32 = tpu.dynamic_rotate %31 by %c126_i32 dim 1 : vector<16x128xf32>, i32 -> vector<16x128xf32>
    %c6_i32 = arith.constant 6 : i32
    %33 = tpu.dynamic_rotate %31 by %c6_i32 dim 1 : vector<16x128xf32>, i32 -> vector<16x128xf32>
    %c6_i32_10 = arith.constant 6 : i32
    %34 = vector.broadcast %c6_i32_10 : i32 to vector<1x128xi32>
    %35 = arith.cmpi slt, %23, %34 : vector<1x128xi32>
    %36 = vector.shape_cast %35 : vector<1x128xi1> to vector<1x128xi1>
    %37 = vector.broadcast %36 : vector<1x128xi1> to vector<16x128xi1>
    %38 = arith.select %37, %32, %33 : vector<16x128xi1>, vector<16x128xf32>
    %39 = arith.addf %31, %38 : vector<16x128xf32>
    %c124_i32 = arith.constant 124 : i32
    %40 = tpu.dynamic_rotate %39 by %c124_i32 dim 1 : vector<16x128xf32>, i32 -> vector<16x128xf32>
    %c4_i32 = arith.constant 4 : i32
    %41 = tpu.dynamic_rotate %39 by %c4_i32 dim 1 : vector<16x128xf32>, i32 -> vector<16x128xf32>
    %c4_i32_11 = arith.constant 4 : i32
    %42 = vector.broadcast %c4_i32_11 : i32 to vector<1x128xi32>
    %43 = arith.cmpi slt, %23, %42 : vector<1x128xi32>
    %44 = vector.shape_cast %43 : vector<1x128xi1> to vector<1x128xi1>
    %45 = vector.broadcast %44 : vector<1x128xi1> to vector<16x128xi1>
    %46 = arith.select %45, %40, %41 : vector<16x128xi1>, vector<16x128xf32>
    %47 = arith.addf %39, %46 : vector<16x128xf32>
    %cst_12 = arith.constant 1.250000e-01 : f32
    %48 = vector.broadcast %cst_12 : f32 to vector<16x128xf32>
    %49 = arith.mulf %47, %48 : vector<16x128xf32>
    %50 = arith.subf %6, %49 : vector<16x128xf32>
    %51 = arith.mulf %50, %50 : vector<16x128xf32>
    %52 = tpu.iota {dimensions = array<i32: 1>} : vector<1x128xi32>
    %c8_i32_13 = arith.constant 8 : i32
    %c0_i32_14 = arith.constant 0 : i32
    %53 = arith.cmpi eq, %c8_i32_13, %c0_i32_14 : i32
    %c1_i32_15 = arith.constant 1 : i32
    %54 = arith.select %53, %c1_i32_15, %c8_i32_13 : i32
    %55 = vector.broadcast %54 : i32 to vector<1x128xi32>
    %56 = arith.remsi %52, %55 : vector<1x128xi32>
    %c0_i32_16 = arith.constant 0 : i32
    %57 = vector.broadcast %c0_i32_16 : i32 to vector<1x128xi32>
    %58 = arith.cmpi ne, %56, %57 : vector<1x128xi32>
    %c0_i32_17 = arith.constant 0 : i32
    %59 = vector.broadcast %c0_i32_17 : i32 to vector<1x128xi32>
    %60 = arith.cmpi slt, %56, %59 : vector<1x128xi32>
    %c0_i32_18 = arith.constant 0 : i32
    %61 = arith.cmpi slt, %54, %c0_i32_18 : i32
    %62 = vector.broadcast %61 : i1 to vector<1x128xi1>
    %63 = vector.broadcast %62 : vector<1x128xi1> to vector<1x128xi1>
    %64 = arith.xori %60, %63 : vector<1x128xi1>
    %65 = arith.andi %64, %58 : vector<1x128xi1>
    %66 = vector.broadcast %54 : i32 to vector<1x128xi32>
    %67 = arith.addi %56, %66 : vector<1x128xi32>
    %68 = arith.select %65, %67, %56 : vector<1x128xi1>, vector<1x128xi32>
    %c127_i32_19 = arith.constant 127 : i32
    %69 = tpu.dynamic_rotate %51 by %c127_i32_19 dim 1 : vector<16x128xf32>, i32 -> vector<16x128xf32>
    %c7_i32_20 = arith.constant 7 : i32
    %70 = tpu.dynamic_rotate %51 by %c7_i32_20 dim 1 : vector<16x128xf32>, i32 -> vector<16x128xf32>
    %c7_i32_21 = arith.constant 7 : i32
    %71 = vector.broadcast %c7_i32_21 : i32 to vector<1x128xi32>
    %72 = arith.cmpi slt, %68, %71 : vector<1x128xi32>
    %73 = vector.shape_cast %72 : vector<1x128xi1> to vector<1x128xi1>
    %74 = vector.broadcast %73 : vector<1x128xi1> to vector<16x128xi1>
    %75 = arith.select %74, %69, %70 : vector<16x128xi1>, vector<16x128xf32>
    %76 = arith.addf %51, %75 : vector<16x128xf32>
    %c126_i32_22 = arith.constant 126 : i32
    %77 = tpu.dynamic_rotate %76 by %c126_i32_22 dim 1 : vector<16x128xf32>, i32 -> vector<16x128xf32>
    %c6_i32_23 = arith.constant 6 : i32
    %78 = tpu.dynamic_rotate %76 by %c6_i32_23 dim 1 : vector<16x128xf32>, i32 -> vector<16x128xf32>
    %c6_i32_24 = arith.constant 6 : i32
    %79 = vector.broadcast %c6_i32_24 : i32 to vector<1x128xi32>
    %80 = arith.cmpi slt, %68, %79 : vector<1x128xi32>
    %81 = vector.shape_cast %80 : vector<1x128xi1> to vector<1x128xi1>
    %82 = vector.broadcast %81 : vector<1x128xi1> to vector<16x128xi1>
    %83 = arith.select %82, %77, %78 : vector<16x128xi1>, vector<16x128xf32>
    %84 = arith.addf %76, %83 : vector<16x128xf32>
    %c124_i32_25 = arith.constant 124 : i32
    %85 = tpu.dynamic_rotate %84 by %c124_i32_25 dim 1 : vector<16x128xf32>, i32 -> vector<16x128xf32>
    %c4_i32_26 = arith.constant 4 : i32
    %86 = tpu.dynamic_rotate %84 by %c4_i32_26 dim 1 : vector<16x128xf32>, i32 -> vector<16x128xf32>
    %c4_i32_27 = arith.constant 4 : i32
    %87 = vector.broadcast %c4_i32_27 : i32 to vector<1x128xi32>
    %88 = arith.cmpi slt, %68, %87 : vector<1x128xi32>
    %89 = vector.shape_cast %88 : vector<1x128xi1> to vector<1x128xi1>
    %90 = vector.broadcast %89 : vector<1x128xi1> to vector<16x128xi1>
    %91 = arith.select %90, %85, %86 : vector<16x128xi1>, vector<16x128xf32>
    %92 = arith.addf %84, %91 : vector<16x128xf32>
    %cst_28 = arith.constant 1.250000e-01 : f32
    %93 = vector.broadcast %cst_28 : f32 to vector<16x128xf32>
    %94 = arith.mulf %92, %93 : vector<16x128xf32>
    %cst_29 = arith.constant 9.99999997E-7 : f32
    %95 = vector.broadcast %cst_29 : f32 to vector<16x128xf32>
    %96 = arith.addf %94, %95 : vector<16x128xf32>
    %97 = math.rsqrt %96 : vector<16x128xf32>
    %98 = arith.mulf %50, %97 : vector<16x128xf32>
    %c0_30 = arith.constant 0 : index
    %c0_31 = arith.constant 0 : index
    %99 = vector.load %arg5[%c0_30, %c0_31] : memref<1x128xf32, #tpu.memory_space<vmem>>, vector<1x128xf32>
    %100 = vector.broadcast %99 : vector<1x128xf32> to vector<16x128xf32>
    %101 = arith.mulf %98, %100 : vector<16x128xf32>
    %c0_32 = arith.constant 0 : index
    %c0_33 = arith.constant 0 : index
    %102 = vector.load %arg6[%c0_32, %c0_33] : memref<1x128xf32, #tpu.memory_space<vmem>>, vector<1x128xf32>
    %103 = vector.broadcast %102 : vector<1x128xf32> to vector<16x128xf32>
    %104 = arith.addf %101, %103 : vector<16x128xf32>
    %c0_34 = arith.constant 0 : index
    %c0_35 = arith.constant 0 : index
    %c0_36 = arith.constant 0 : index
    %105 = vector.load %arg2[%c0_34, %c0_35, %c0_36] : memref<1x16x128xf32, #tpu.memory_space<vmem>>, vector<1x16x128xf32>
    %106 = vector.shape_cast %105 : vector<1x16x128xf32> to vector<16x128xf32>
    %cst_37 = arith.constant 1.000000e+00 : f32
    %107 = vector.broadcast %cst_37 : f32 to vector<16x128xf32>
    %108 = arith.subf %107, %106 : vector<16x128xf32>
    %109 = arith.mulf %104, %108 : vector<16x128xf32>
    %c0_38 = arith.constant 0 : index
    %c0_39 = arith.constant 0 : index
    %c0_40 = arith.constant 0 : index
    %110 = vector.load %arg7[%c0_38, %c0_39, %c0_40] : memref<1x16x128xf32, #tpu.memory_space<vmem>>, vector<1x16x128xf32>
    %111 = vector.shape_cast %110 : vector<1x16x128xf32> to vector<16x128xf32>
    %112 = vector.shape_cast %109 : vector<16x128xf32> to vector<1x16x128xf32>
    tpu.vector_store %arg7[%c0_38, %c0_39, %c0_40], %112 {strides = array<i32>} : memref<1x16x128xf32, #tpu.memory_space<vmem>>, vector<1x16x128xf32>,
    return
  }
  func.func @transform_0(%arg0: i32) -> (i32, i32, i32) {
    %c0_i32 = arith.constant 0 : i32
    %c0_i32_0 = arith.constant 0 : i32
    %c0_i32_1 = arith.constant 0 : i32
    return %arg0, %c0_i32, %c0_i32_0 : i32, i32, i32
  }
  func.func @transform_1(%arg0: i32) -> (i32, i32, i32) {
    %c0_i32 = arith.constant 0 : i32
    %c0_i32_0 = arith.constant 0 : i32
    %c0_i32_1 = arith.constant 0 : i32
    return %arg0, %c0_i32, %c0_i32_0 : i32, i32, i32
  }
  func.func @transform_2(%arg0: i32) -> (i32, i32) {
    %c0_i32 = arith.constant 0 : i32
    %c0_i32_0 = arith.constant 0 : i32
    %c0_i32_1 = arith.constant 0 : i32
    return %c0_i32, %c0_i32_0 : i32, i32
  }
  func.func @transform_3(%arg0: i32) -> (i32, i32) {
    %c0_i32 = arith.constant 0 : i32
    %c0_i32_0 = arith.constant 0 : i32
    %c0_i32_1 = arith.constant 0 : i32
    return %c0_i32, %c0_i32_0 : i32, i32
  }
  func.func @transform_4(%arg0: i32) -> (i32, i32) {
    %c0_i32 = arith.constant 0 : i32
    %c0_i32_0 = arith.constant 0 : i32
    %c0_i32_1 = arith.constant 0 : i32
    return %c0_i32, %c0_i32_0 : i32, i32
  }
  func.func @transform_5(%arg0: i32) -> (i32, i32) {
    %c0_i32 = arith.constant 0 : i32
    %c0_i32_0 = arith.constant 0 : i32
    %c0_i32_1 = arith.constant 0 : i32
    return %c0_i32, %c0_i32_0 : i32, i32
  }
  func.func @transform_6(%arg0: i32) -> (i32, i32, i32) {
    %c0_i32 = arith.constant 0 : i32
    %c0_i32_0 = arith.constant 0 : i32
    %c0_i32_1 = arith.constant 0 : i32
    return %arg0, %c0_i32, %c0_i32_0 : i32, i32, i32
  }
}

</mosaic_0001>

<llo_original>
// kernel: tpu_custom_call.1
$region0: #{tpu_custom_call.1}
  #allocation0 [shape = 'u32[]', space=smem, size = 0x4, offset = 0x4, fixed_abs, tag = 'smem constant byte address 0x4 - core index']
  #allocation1 [shape = 'u32[144,128]{1,0:T(1,128)}', space=vmem, size = 0x12000, scoped, tag = 'internal scratch']
  %s0 = inlined_call_operand.hbm [shape: bf16[2,16,768], index: 0, kind: input, shape index: {}]
  %s1 = inlined_call_operand.hbm [shape: f32[2,16,128], index: 1, kind: input, shape index: {}]
  %s2 = inlined_call_operand.hbm [shape: bf16[768,128], index: 2, kind: input, shape index: {}]
  %s3 = inlined_call_operand.vmem [shape: f32[1,128], index: 3, kind: input, shape index: {}]
  %s4 = inlined_call_operand.vmem [shape: f32[1,128], index: 4, kind: input, shape index: {}]
  %s5 = inlined_call_operand.vmem [shape: f32[1,128], index: 5, kind: input, shape index: {}]
  %s6 = inlined_call_operand.hbm [shape: f32[2,16,128], index: 6, kind: output, shape index: {}]
  %s7 = sld [smem:[#allocation0]]
  $region69: #{tpu_custom_call.1} parent=0
    _
  %s9 = ssub.s32 1, %s7
  %s10 = scalar_select 0, %s9, %s7
  $region1: #{tpu_custom_call.1} parent=0
    #allocation2 [shape = 'u8[49152]{0}', space=vmem, size = 0xc000, scoped, tag = 'input window, operand 0']
    #allocation3 [shape = 's32[2]{0}', space=sflag, size = 0x8, scoped, tag = 'scoped memory for tpu_custom_call.1']
    #allocation4 [shape = 's32[2]{0}', space=sflag, size = 0x8, scoped, tag = 'scoped memory for tpu_custom_call.1']
    #allocation5 [shape = 'u8[16384]{0}', space=vmem, size = 0x4000, scoped, tag = 'input window, operand 1']
    #allocation6 [shape = 's32[2]{0}', space=sflag, size = 0x8, scoped, tag = 'scoped memory for tpu_custom_call.1']
    #allocation7 [shape = 'u8[196608]{0}', space=vmem, size = 0x30000, scoped, tag = 'input window, operand 2, single buffered']
    #allocation8 [shape = 'u8[16384]{0}', space=vmem, size = 0x4000, scoped, tag = 'output window, operand 0']
    %11 = vsyncpa [#allocation3], 0
    %s12 = scalar_lea.sflag [#allocation3], 1
    %13 = vsyncpa %s12, 0
    %14 = vsyncpa [#allocation6], 0
    %s15 = scalar_lea.sflag [#allocation6], 1
    %16 = vsyncpa %s15, 0
    %17 = vsyncpa [#allocation4], 0
    %s18 = scalar_lea.sflag [#allocation4], 1
    %19 = vsyncpa %s18, 0
    loop: start=0, step=1, limit=4
    $region2: #{tpu_custom_call.1} parent=1 // loop_pre_header
      _
    $region3: #{tpu_custom_call.1} parent=1 // loop_header
      %s21 = sphi 0, %s25
      %p22 = scmp.ge.s32.totalorder %s21, 4
      %s31 = sphi 0, %s33
      %s34 = sphi 0, %s31
      %s35 = sphi 0, %s34
      %s51 = sphi 0, %s35
      %s57 = sphi 0, %s59
      %s60 = sphi 0, %s57
      %s61 = sphi 0, %s60
      %s77 = sphi 0, %s61
      %s81 = sphi 0, %s81
      %s83 = sphi 0, %s81
      %s84 = sphi 0, %s83
      %s98 = sphi 0, %s84
      %s102 = sphi 0, %s102
      %s104 = sphi 0, %s102
      %s105 = sphi 0, %s104
      %s119 = sphi 0, %s105
      %s123 = sphi 0, %s123
      %s125 = sphi 0, %s123
      %s126 = sphi 0, %s125
      %s140 = sphi 0, %s126
      %s144 = sphi 0, %s144
      %s146 = sphi 0, %s144
      %s147 = sphi 0, %s146
      %s161 = sphi 0, %s147
      %s167 = sphi 0, %s169
      %s170 = sphi 0, %s167
      %s171 = sphi 0, %s170
      %s187 = sphi 0, %s171
    $region4: #{tpu_custom_call.1} parent=1 // loop_header_branch
      %24 = sbr.rel (%p22) target = $region8
    $region5: #{tpu_custom_call.1} parent=1 // loop_body
      %s26 = ssub.s32 %s21, 1
      %s27 = ssub.s32 %s21, 2
      %s28 = sadd.s32 %s21, 1
      %s29 = ssub.s32 %s21, %s28
      %p30 = scmp.eq.s32.totalorder %s29, 0
      %s32 = sadd.s32 %s31, 1
      %s33 = scalar_select %p30, %s31, %s32
      %p36 = pneg %p30
      %p37 = scmp.eq.s32.totalorder %s21, 1
      %p38 = por %p36, %p37
      %p39 = scmp.ne.s32.totalorder %s31, %s34
      %p40 = scmp.eq.s32.totalorder %s21, 0
      %p41 = por %p39, %p40
      %p42 = scmp.ne.s32.totalorder %s31, %s34
      %p43 = scmp.eq.s32.totalorder %s26, 1
      %p44 = por %p42, %p43
      %p45 = scmp.ne.s32.totalorder %s34, %s35
      %p46 = scmp.eq.s32.totalorder %s26, 0
      %p47 = por %p45, %p46
      %p48 = scmp.ne.s32.totalorder %s34, %s35
      %p49 = scmp.eq.s32.totalorder %s27, 1
      %p50 = por %p48, %p49
      %p52 = scmp.ne.s32.totalorder %s35, %s51
      %p53 = scmp.eq.s32.totalorder %s27, 0
      %p54 = por %p52, %p53
      %s55 = ssub.s32 %s21, %s28
      %p56 = scmp.eq.s32.totalorder %s55, 0
      %s58 = sadd.s32 %s57, 1
      %s59 = scalar_select %p56, %s57, %s58
      %p62 = pneg %p56
      %p63 = scmp.eq.s32.totalorder %s21, 1
      %p64 = por %p62, %p63
      %p65 = scmp.ne.s32.totalorder %s57, %s60
      %p66 = scmp.eq.s32.totalorder %s21, 0
      %p67 = por %p65, %p66
      %p68 = scmp.ne.s32.totalorder %s57, %s60
      %p69 = scmp.eq.s32.totalorder %s26, 1
      %p70 = por %p68, %p69
      %p71 = scmp.ne.s32.totalorder %s60, %s61
      %p72 = scmp.eq.s32.totalorder %s26, 0
      %p73 = por %p71, %p72
      %p74 = scmp.ne.s32.totalorder %s60, %s61
      %p75 = scmp.eq.s32.totalorder %s27, 1
      %p76 = por %p74, %p75
      %p78 = scmp.ne.s32.totalorder %s61, %s77
      %p79 = scmp.eq.s32.totalorder %s27, 0
      %p80 = por %p78, %p79
      %s82 = sadd.s32 %s81, 1
      %p85 = scmp.eq.s32.totalorder %s21, 1
      %p86 = scmp.ne.s32.totalorder %s81, %s83
      %p87 = scmp.eq.s32.totalorder %s21, 0
      %p88 = por %p86, %p87
      %p89 = scmp.ne.s32.totalorder %s81, %s83
      %p90 = scmp.eq.s32.totalorder %s26, 1
      %p91 = por %p89, %p90
      %p92 = scmp.ne.s32.totalorder %s83, %s84
      %p93 = scmp.eq.s32.totalorder %s26, 0
      %p94 = por %p92, %p93
      %p95 = scmp.ne.s32.totalorder %s83, %s84
      %p96 = scmp.eq.s32.totalorder %s27, 1
      %p97 = por %p95, %p96
      %p99 = scmp.ne.s32.totalorder %s84, %s98
      %p100 = scmp.eq.s32.totalorder %s27, 0
      %p101 = por %p99, %p100
      %s103 = sadd.s32 %s102, 1
      %p106 = scmp.eq.s32.totalorder %s21, 1
      %p107 = scmp.ne.s32.totalorder %s102, %s104
      %p108 = scmp.eq.s32.totalorder %s21, 0
      %p109 = por %p107, %p108
      %p110 = scmp.ne.s32.totalorder %s102, %s104
      %p111 = scmp.eq.s32.totalorder %s26, 1
      %p112 = por %p110, %p111
      %p113 = scmp.ne.s32.totalorder %s104, %s105
      %p114 = scmp.eq.s32.totalorder %s26, 0
      %p115 = por %p113, %p114
      %p116 = scmp.ne.s32.totalorder %s104, %s105
      %p117 = scmp.eq.s32.totalorder %s27, 1
      %p118 = por %p116, %p117
      %p120 = scmp.ne.s32.totalorder %s105, %s119
      %p121 = scmp.eq.s32.totalorder %s27, 0
      %p122 = por %p120, %p121
      %s124 = sadd.s32 %s123, 1
      %p127 = scmp.eq.s32.totalorder %s21, 1
      %p128 = scmp.ne.s32.totalorder %s123, %s125
      %p129 = scmp.eq.s32.totalorder %s21, 0
      %p130 = por %p128, %p129
      %p131 = scmp.ne.s32.totalorder %s123, %s125
      %p132 = scmp.eq.s32.totalorder %s26, 1
      %p133 = por %p131, %p132
      %p134 = scmp.ne.s32.totalorder %s125, %s126
      %p135 = scmp.eq.s32.totalorder %s26, 0
      %p136 = por %p134, %p135
      %p137 = scmp.ne.s32.totalorder %s125, %s126
      %p138 = scmp.eq.s32.totalorder %s27, 1
      %p139 = por %p137, %p138
      %p141 = scmp.ne.s32.totalorder %s126, %s140
      %p142 = scmp.eq.s32.totalorder %s27, 0
      %p143 = por %p141, %p142
      %s145 = sadd.s32 %s144, 1
      %p148 = scmp.eq.s32.totalorder %s21, 1
      %p149 = scmp.ne.s32.totalorder %s144, %s146
      %p150 = scmp.eq.s32.totalorder %s21, 0
      %p151 = por %p149, %p150
      %p152 = scmp.ne.s32.totalorder %s144, %s146
      %p153 = scmp.eq.s32.totalorder %s26, 1
      %p154 = por %p152, %p153
      %p155 = scmp.ne.s32.totalorder %s146, %s147
      %p156 = scmp.eq.s32.totalorder %s26, 0
      %p157 = por %p155, %p156
      %p158 = scmp.ne.s32.totalorder %s146, %s147
      %p159 = scmp.eq.s32.totalorder %s27, 1
      %p160 = por %p158, %p159
      %p162 = scmp.ne.s32.totalorder %s147, %s161
      %p163 = scmp.eq.s32.totalorder %s27, 0
      %p164 = por %p162, %p163
      %s165 = ssub.s32 %s21, %s28
      %p166 = scmp.eq.s32.totalorder %s165, 0
      %s168 = sadd.s32 %s167, 1
      %s169 = scalar_select %p166, %s167, %s168
      %p172 = pneg %p166
      %p173 = scmp.eq.s32.totalorder %s21, 1
      %p174 = por %p172, %p173
      %p175 = scmp.ne.s32.totalorder %s167, %s170
      %p176 = scmp.eq.s32.totalorder %s21, 0
      %p177 = por %p175, %p176
      %p178 = scmp.ne.s32.totalorder %s167, %s170
      %p179 = scmp.eq.s32.totalorder %s26, 1
      %p180 = por %p178, %p179
      %p181 = scmp.ne.s32.totalorder %s170, %s171
      %p182 = scmp.eq.s32.totalorder %s26, 0
      %p183 = por %p181, %p182
      %p184 = scmp.ne.s32.totalorder %s170, %s171
      %p185 = scmp.eq.s32.totalorder %s27, 1
      %p186 = por %p184, %p185
      %p188 = scmp.ne.s32.totalorder %s171, %s187
      %p189 = scmp.eq.s32.totalorder %s27, 0
      %p190 = por %p188, %p189
      %p191 = scmp.le.s32.totalorder 1, %s21
      %p192 = scmp.lt.s32.totalorder %s21, 3
      %p193 = pnand %p191, %p192
      %p194 = pneg %p193
      // Predicated region
      $region9: #{tpu_custom_call.1} parent=5 // pred_check
        _
      $region10: #{tpu_custom_call.1} parent=5 // pred_check_branch
        %196 = sbr.rel (%p193) target = $region12
      $region11: #{tpu_custom_call.1} parent=5 // pred_region
        %s197 = ssub.s32 %s21, 1
        // Predicated region
        $region13: #{tpu_custom_call.1} parent=11 // pred_check
          %p198 = pneg %p94
        $region14: #{tpu_custom_call.1} parent=11 // pred_check_branch
          %200 = sbr.rel (%p198) target = $region16
        $region15: #{tpu_custom_call.1} parent=11 // pred_region
          %s202 = ssub.s32 6144, 6144
          %203 = vsyncadd [#allocation6], %s202
          %s204 = sshll.u32 [#allocation7], 4
          %s205 = int_to_ptr.vmem [resolvable:$true] %s204
          %210 = dma.hbm_to_vmem [thread:$0]  %s2, 6144, %s205, [#allocation6], 64, 64, 4
        $region16: #{tpu_custom_call.1} parent=11 // pred_fallthru
          _
        // Predicated region
        $region17: #{tpu_custom_call.1} parent=11 // pred_check
          %p211 = pneg %p115
        $region18: #{tpu_custom_call.1} parent=11 // pred_check_branch
          %213 = sbr.rel (%p211) target = $region20
        $region19: #{tpu_custom_call.1} parent=11 // pred_region
          _
        $region20: #{tpu_custom_call.1} parent=11 // pred_fallthru
          _
        // Predicated region
        $region21: #{tpu_custom_call.1} parent=11 // pred_check
          %p214 = pneg %p136
        $region22: #{tpu_custom_call.1} parent=11 // pred_check_branch
          %216 = sbr.rel (%p214) target = $region24
        $region23: #{tpu_custom_call.1} parent=11 // pred_region
          _
        $region24: #{tpu_custom_call.1} parent=11 // pred_fallthru
          _
        // Predicated region
        $region25: #{tpu_custom_call.1} parent=11 // pred_check
          %p217 = pneg %p157
        $region26: #{tpu_custom_call.1} parent=11 // pred_check_branch
          %219 = sbr.rel (%p217) target = $region28
        $region27: #{tpu_custom_call.1} parent=11 // pred_region
          _
        $region28: #{tpu_custom_call.1} parent=11 // pred_fallthru
          _
      $region12: #{tpu_custom_call.1} parent=5 // pred_fallthru
        _
      %p220 = scmp.lt.s32.totalorder %s21, 2
      // Predicated region
      $region29: #{tpu_custom_call.1} parent=5 // pred_check
        %p221 = pneg %p220
      $region30: #{tpu_custom_call.1} parent=5 // pred_check_branch
        %223 = sbr.rel (%p221) target = $region32
      $region31: #{tpu_custom_call.1} parent=5 // pred_region
        // Predicated region
        $region33: #{tpu_custom_call.1} parent=31 // pred_check
          %p224 = pneg %p41
        $region34: #{tpu_custom_call.1} parent=31 // pred_check_branch
          %226 = sbr.rel (%p224) target = $region36
        $region35: #{tpu_custom_call.1} parent=31 // pred_region
          %s227 = sand.u32 %s31, 1
          %s228 = scalar_lea.sflag [#allocation3], %s227
          %s229 = sand.u32 %s31, 1
          %s230 = smul.addr %s229, 48
          %s231 = scalar_lea.vmem [#allocation2], %s230
          %s233 = ssub.s32 768, 768
          %234 = vsyncadd %s228, %s233
          %s235 = smul.addr %s21, 12
          %s236 = smul.addr %s235, 64
          %s237 = scalar_lea.hbm %s0, %s236
          %s238 = sshll.u32 %s231, 4
          %s239 = int_to_ptr.vmem [resolvable:$true] %s238
          %244 = dma.hbm_to_vmem [thread:$0]  %s237, 768, %s239, %s228, 384, 384, 24
        $region36: #{tpu_custom_call.1} parent=31 // pred_fallthru
          _
        // Predicated region
        $region37: #{tpu_custom_call.1} parent=31 // pred_check
          %p245 = pneg %p67
        $region38: #{tpu_custom_call.1} parent=31 // pred_check_branch
          %247 = sbr.rel (%p245) target = $region40
        $region39: #{tpu_custom_call.1} parent=31 // pred_region
          %s248 = sand.u32 %s21, 1
          %s249 = scalar_lea.sflag [#allocation6], %s248
          %s250 = sand.u32 %s57, 1
          %s251 = smul.addr %s250, 16
          %s252 = scalar_lea.vmem [#allocation5], %s251
          %s254 = ssub.s32 256, 256
          %255 = vsyncadd %s249, %s254
          %s256 = smul.addr %s21, 2
          %s257 = smul.addr %s256, 128
          %s258 = scalar_lea.hbm %s1, %s257
          %s259 = sshll.u32 %s252, 4
          %s260 = int_to_ptr.vmem [resolvable:$true] %s259
          %265 = dma.hbm_to_vmem [thread:$0]  %s258, 256, %s260, %s249, 128, 128, 8
        $region40: #{tpu_custom_call.1} parent=31 // pred_fallthru
          _
      $region32: #{tpu_custom_call.1} parent=5 // pred_fallthru
        _
      %p266 = scmp.le.s32.totalorder 1, %s21
      %p267 = scmp.lt.s32.totalorder %s21, 3
      %p268 = pnand %p266, %p267
      %p269 = pneg %p268
      // Predicated region
      $region41: #{tpu_custom_call.1} parent=5 // pred_check
        _
      $region42: #{tpu_custom_call.1} parent=5 // pred_check_branch
        %271 = sbr.rel (%p268) target = $region44
      $region43: #{tpu_custom_call.1} parent=5 // pred_region
        %s272 = ssub.s32 %s21, 1
        %s273 = sand.u32 %s34, 1
        %s274 = scalar_lea.sflag [#allocation3], %s273
        %s275 = sand.u32 %s34, 1
        %s276 = smul.addr %s275, 48
        %s277 = scalar_lea.vmem [#allocation2], %s276
        // Predicated region
        $region45: #{tpu_custom_call.1} parent=43 // pred_check
          %p278 = pneg %p47
        $region46: #{tpu_custom_call.1} parent=43 // pred_check_branch
          %280 = sbr.rel (%p278) target = $region48
        $region47: #{tpu_custom_call.1} parent=43 // pred_region
          %281 = dma.done %s274, 768
        $region48: #{tpu_custom_call.1} parent=43 // pred_fallthru
          _
        %s282 = sand.u32 %s26, 1
        %s283 = scalar_lea.sflag [#allocation6], %s282
        %s284 = sand.u32 %s60, 1
        %s285 = smul.addr %s284, 16
        %s286 = scalar_lea.vmem [#allocation5], %s285
        // Predicated region
        $region49: #{tpu_custom_call.1} parent=43 // pred_check
          %p287 = pneg %p73
        $region50: #{tpu_custom_call.1} parent=43 // pred_check_branch
          %289 = sbr.rel (%p287) target = $region52
        $region51: #{tpu_custom_call.1} parent=43 // pred_region
          %290 = dma.done %s283, 256
        $region52: #{tpu_custom_call.1} parent=43 // pred_fallthru
          _
        // Predicated region
        $region53: #{tpu_custom_call.1} parent=43 // pred_check
          %p291 = pneg %p94
        $region54: #{tpu_custom_call.1} parent=43 // pred_check_branch
          %293 = sbr.rel (%p291) target = $region56
        $region55: #{tpu_custom_call.1} parent=43 // pred_region
          %294 = dma.done [#allocation6], 6144
        $region56: #{tpu_custom_call.1} parent=43 // pred_fallthru
          _
        %s295 = sand.u32 %s34, 1
        %s296 = scalar_lea.sflag [#allocation3], %s295
        %s297 = sand.u32 %s34, 1
        %s298 = smul.addr %s297, 48
        %s299 = scalar_lea.vmem [#allocation2], %s298
        %p300 = pneg %p47
        %p301 = pneg %p44
        %s302 = sand.u32 %s26, 1
        %s303 = scalar_lea.sflag [#allocation6], %s302
        %s304 = sand.u32 %s60, 1
        %s305 = smul.addr %s304, 16
        %s306 = scalar_lea.vmem [#allocation5], %s305
        %p307 = pneg %p73
        %p308 = pneg %p70
        %p309 = pneg %p94
        %p310 = pneg %p91
        %p311 = pneg %p115
        %p312 = pneg %p112
        %p313 = pneg %p136
        %p314 = pneg %p133
        %p315 = pneg %p157
        %p316 = pneg %p154
        %p317 = pneg %p183
        %p318 = pneg %p180
        %s319 = sand.u32 %s170, 1
        %s320 = scalar_lea.sflag [#allocation4], %s319
        %s321 = sand.u32 %s170, 1
        %s322 = smul.addr %s321, 16
        %s323 = scalar_lea.vmem [#allocation8], %s322
        %v325 = vld [vmem:[%s277] sm:$0xff]
        %v326 = vld [vmem:[%s277 + $0x8] sm:$0xff]
        %v327 = vld [vmem:[%s277 + $0x10] sm:$0xff]
        %v328 = vld [vmem:[%s277 + $0x18] sm:$0xff]
        %v329 = vld [vmem:[%s277 + $0x20] sm:$0xff]
        %v330 = vld [vmem:[%s277 + $0x28] sm:$0xff]
        %v331 = vld [vmem:[#allocation7] sm:$0xf]
        %v332 = vld [vmem:[#allocation7 + $0x4] sm:$0xf]
        %v333 = vld [vmem:[#allocation7 + $0x8] sm:$0xf]
        %v334 = vld [vmem:[#allocation7 + $0xc] sm:$0xf]
        %v335 = vld [vmem:[#allocation7 + $0x10] sm:$0xf]
        %v336 = vld [vmem:[#allocation7 + $0x14] sm:$0xf]
        %v337 = vld [vmem:[#allocation7 + $0x18] sm:$0xf]
        %v338 = vld [vmem:[#allocation7 + $0x1c] sm:$0xf]
        %v339 = vld [vmem:[#allocation7 + $0x20] sm:$0xf]
        %v340 = vld [vmem:[#allocation7 + $0x24] sm:$0xf]
        %v341 = vld [vmem:[#allocation7 + $0x28] sm:$0xf]
        %v342 = vld [vmem:[#allocation7 + $0x2c] sm:$0xf]
        %v343 = vld [vmem:[#allocation7 + $0x30] sm:$0xf]
        %v344 = vld [vmem:[#allocation7 + $0x34] sm:$0xf]
        %v345 = vld [vmem:[#allocation7 + $0x38] sm:$0xf]
        %v346 = vld [vmem:[#allocation7 + $0x3c] sm:$0xf]
        %v347 = vld [vmem:[#allocation7 + $0x40] sm:$0xf]
        %v348 = vld [vmem:[#allocation7 + $0x44] sm:$0xf]
        %v349 = vld [vmem:[#allocation7 + $0x48] sm:$0xf]
        %v350 = vld [vmem:[#allocation7 + $0x4c] sm:$0xf]
        %v351 = vld [vmem:[#allocation7 + $0x50] sm:$0xf]
        %v352 = vld [vmem:[#allocation7 + $0x54] sm:$0xf]
        %v353 = vld [vmem:[#allocation7 + $0x58] sm:$0xf]
        %v354 = vld [vmem:[#allocation7 + $0x5c] sm:$0xf]
        %v355 = vld [vmem:[#allocation7 + $0x60] sm:$0xf]
        %v356 = vld [vmem:[#allocation7 + $0x64] sm:$0xf]
        %v357 = vld [vmem:[#allocation7 + $0x68] sm:$0xf]
        %v358 = vld [vmem:[#allocation7 + $0x6c] sm:$0xf]
        %v359 = vld [vmem:[#allocation7 + $0x70] sm:$0xf]
        %v360 = vld [vmem:[#allocation7 + $0x74] sm:$0xf]
        %v361 = vld [vmem:[#allocation7 + $0x78] sm:$0xf]
        %v362 = vld [vmem:[#allocation7 + $0x7c] sm:$0xf]
        %v363 = vld [vmem:[#allocation7 + $0x80] sm:$0xf]
        %v364 = vld [vmem:[#allocation7 + $0x84] sm:$0xf]
        %v365 = vld [vmem:[#allocation7 + $0x88] sm:$0xf]
        %v366 = vld [vmem:[#allocation7 + $0x8c] sm:$0xf]
        %v367 = vld [vmem:[#allocation7 + $0x90] sm:$0xf]
        %v368 = vld [vmem:[#allocation7 + $0x94] sm:$0xf]
        %v369 = vld [vmem:[#allocation7 + $0x98] sm:$0xf]
        %v370 = vld [vmem:[#allocation7 + $0x9c] sm:$0xf]
        %v371 = vld [vmem:[#allocation7 + $0xa0] sm:$0xf]
        %v372 = vld [vmem:[#allocation7 + $0xa4] sm:$0xf]
        %v373 = vld [vmem:[#allocation7 + $0xa8] sm:$0xf]
        %v374 = vld [vmem:[#allocation7 + $0xac] sm:$0xf]
        %v375 = vld [vmem:[#allocation7 + $0xb0] sm:$0xf]
        %v376 = vld [vmem:[#allocation7 + $0xb4] sm:$0xf]
        %v377 = vld [vmem:[#allocation7 + $0xb8] sm:$0xf]
        %v378 = vld [vmem:[#allocation7 + $0xbc] sm:$0xf]
        %v379 = vld [vmem:[#allocation7 + $0xc0] sm:$0xf]
        %v380 = vld [vmem:[#allocation7 + $0xc4] sm:$0xf]
        %v381 = vld [vmem:[#allocation7 + $0xc8] sm:$0xf]
        %v382 = vld [vmem:[#allocation7 + $0xcc] sm:$0xf]
        %v383 = vld [vmem:[#allocation7 + $0xd0] sm:$0xf]
        %v384 = vld [vmem:[#allocation7 + $0xd4] sm:$0xf]
        %v385 = vld [vmem:[#allocation7 + $0xd8] sm:$0xf]
        %v386 = vld [vmem:[#allocation7 + $0xdc] sm:$0xf]
        %v387 = vld [vmem:[#allocation7 + $0xe0] sm:$0xf]
        %v388 = vld [vmem:[#allocation7 + $0xe4] sm:$0xf]
        %v389 = vld [vmem:[#allocation7 + $0xe8] sm:$0xf]
        %v390 = vld [vmem:[#allocation7 + $0xec] sm:$0xf]
        %v391 = vld [vmem:[#allocation7 + $0xf0] sm:$0xf]
        %v392 = vld [vmem:[#allocation7 + $0xf4] sm:$0xf]
        %v393 = vld [vmem:[#allocation7 + $0xf8] sm:$0xf]
        %v394 = vld [vmem:[#allocation7 + $0xfc] sm:$0xf]
        %v395 = vld [vmem:[#allocation7 + $0x100] sm:$0xf]
        %v396 = vld [vmem:[#allocation7 + $0x104] sm:$0xf]
        %v397 = vld [vmem:[#allocation7 + $0x108] sm:$0xf]
        %v398 = vld [vmem:[#allocation7 + $0x10c] sm:$0xf]
        %v399 = vld [vmem:[#allocation7 + $0x110] sm:$0xf]
        %v400 = vld [vmem:[#allocation7 + $0x114] sm:$0xf]
        %v401 = vld [vmem:[#allocation7 + $0x118] sm:$0xf]
        %v402 = vld [vmem:[#allocation7 + $0x11c] sm:$0xf]
        %v403 = vld [vmem:[#allocation7 + $0x120] sm:$0xf]
        %v404 = vld [vmem:[#allocation7 + $0x124] sm:$0xf]
        %v405 = vld [vmem:[#allocation7 + $0x128] sm:$0xf]
        %v406 = vld [vmem:[#allocation7 + $0x12c] sm:$0xf]
        %v407 = vld [vmem:[#allocation7 + $0x130] sm:$0xf]
        %v408 = vld [vmem:[#allocation7 + $0x134] sm:$0xf]
        %v409 = vld [vmem:[#allocation7 + $0x138] sm:$0xf]
        %v410 = vld [vmem:[#allocation7 + $0x13c] sm:$0xf]
        %v411 = vld [vmem:[#allocation7 + $0x140] sm:$0xf]
        %v412 = vld [vmem:[#allocation7 + $0x144] sm:$0xf]
        %v413 = vld [vmem:[#allocation7 + $0x148] sm:$0xf]
        %v414 = vld [vmem:[#allocation7 + $0x14c] sm:$0xf]
        %v415 = vld [vmem:[#allocation7 + $0x150] sm:$0xf]
        %v416 = vld [vmem:[#allocation7 + $0x154] sm:$0xf]
        %v417 = vld [vmem:[#allocation7 + $0x158] sm:$0xf]
        %v418 = vld [vmem:[#allocation7 + $0x15c] sm:$0xf]
        %v419 = vld [vmem:[#allocation7 + $0x160] sm:$0xf]
        %v420 = vld [vmem:[#allocation7 + $0x164] sm:$0xf]
        %v421 = vld [vmem:[#allocation7 + $0x168] sm:$0xf]
        %v422 = vld [vmem:[#allocation7 + $0x16c] sm:$0xf]
        %v423 = vld [vmem:[#allocation7 + $0x170] sm:$0xf]
        %v424 = vld [vmem:[#allocation7 + $0x174] sm:$0xf]
        %v425 = vld [vmem:[#allocation7 + $0x178] sm:$0xf]
        %v426 = vld [vmem:[#allocation7 + $0x17c] sm:$0xf]
        %v427 = vld [vmem:[%s3] sm:$0x1]
        %v429 = vlaneseq
        %v430 = vshrl.u32 %v429, 7
        %v431 = vsub.s32 0, %v430
        %v432 = vrot.slane %v427, %v431
        %v440 = vunpack.c.l.b16 %v325
        %v441 = vunpack.c.h.b16 %v325
        %v442 = vunpack.c.l.b16 %v326
        %v443 = vunpack.c.h.b16 %v326
        %v444 = vunpack.c.l.b16 %v327
        %v445 = vunpack.c.h.b16 %v327
        %v446 = vunpack.c.l.b16 %v328
        %v447 = vunpack.c.h.b16 %v328
        %v448 = vunpack.c.l.b16 %v329
        %v449 = vunpack.c.h.b16 %v329
        %v450 = vunpack.c.l.b16 %v330
        %v451 = vunpack.c.h.b16 %v330
        %v452 = vpack.c.b16 %v446, %v440
        %v453 = vpack.c.b16 %v447, %v441
        %v454 = vpack.c.b16 %v448, %v442
        %v455 = vpack.c.b16 %v449, %v443
        %v456 = vpack.c.b16 %v450, %v444
        %v457 = vpack.c.b16 %v451, %v445
        %v560 = vunpack.c.l.b16 %v331
        %v561 = vunpack.c.l.b16 %v332
        %v562 = vunpack.c.l.b16 %v333
        %v563 = vunpack.c.l.b16 %v334
        %v564 = vunpack.c.l.b16 %v335
        %v565 = vunpack.c.l.b16 %v336
        %v566 = vunpack.c.l.b16 %v337
        %v567 = vunpack.c.l.b16 %v338
        %v568 = vunpack.c.l.b16 %v339
        %v569 = vunpack.c.l.b16 %v340
        %v570 = vunpack.c.l.b16 %v341
        %v571 = vunpack.c.l.b16 %v342
        %v572 = vunpack.c.l.b16 %v343
        %v573 = vunpack.c.l.b16 %v344
        %v574 = vunpack.c.l.b16 %v345
        %v575 = vunpack.c.l.b16 %v346
        %v576 = vunpack.c.l.b16 %v347
        %v577 = vunpack.c.l.b16 %v348
        %v578 = vunpack.c.l.b16 %v349
        %v579 = vunpack.c.l.b16 %v350
        %v580 = vunpack.c.l.b16 %v351
        %v581 = vunpack.c.l.b16 %v352
        %v582 = vunpack.c.l.b16 %v353
        %v583 = vunpack.c.l.b16 %v354
        %v584 = vunpack.c.l.b16 %v355
        %v585 = vunpack.c.l.b16 %v356
        %v586 = vunpack.c.l.b16 %v357
        %v587 = vunpack.c.l.b16 %v358
        %v588 = vunpack.c.l.b16 %v359
        %v589 = vunpack.c.l.b16 %v360
        %v590 = vunpack.c.l.b16 %v361
        %v591 = vunpack.c.l.b16 %v362
        %v592 = vunpack.c.l.b16 %v363
        %v593 = vunpack.c.l.b16 %v364
        %v594 = vunpack.c.l.b16 %v365
        %v595 = vunpack.c.l.b16 %v366
        %v596 = vunpack.c.l.b16 %v367
        %v597 = vunpack.c.l.b16 %v368
        %v598 = vunpack.c.l.b16 %v369
        %v599 = vunpack.c.l.b16 %v370
        %v600 = vunpack.c.l.b16 %v371
        %v601 = vunpack.c.l.b16 %v372
        %v602 = vunpack.c.l.b16 %v373
        %v603 = vunpack.c.l.b16 %v374
        %v604 = vunpack.c.l.b16 %v375
        %v605 = vunpack.c.l.b16 %v376
        %v606 = vunpack.c.l.b16 %v377
        %v607 = vunpack.c.l.b16 %v378
        %v608 = vunpack.c.l.b16 %v379
        %v609 = vunpack.c.l.b16 %v380
        %v610 = vunpack.c.l.b16 %v381
        %v611 = vunpack.c.l.b16 %v382
        %v612 = vunpack.c.l.b16 %v383
        %v613 = vunpack.c.l.b16 %v384
        %v614 = vunpack.c.l.b16 %v385
        %v615 = vunpack.c.l.b16 %v386
        %v616 = vunpack.c.l.b16 %v387
        %v617 = vunpack.c.l.b16 %v388
        %v618 = vunpack.c.l.b16 %v389
        %v619 = vunpack.c.l.b16 %v390
        %v620 = vunpack.c.l.b16 %v391
        %v621 = vunpack.c.l.b16 %v392
        %v622 = vunpack.c.l.b16 %v393
        %v623 = vunpack.c.l.b16 %v394
        %v624 = vunpack.c.l.b16 %v395
        %v625 = vunpack.c.l.b16 %v396
        %v626 = vunpack.c.l.b16 %v397
        %v627 = vunpack.c.l.b16 %v398
        %v628 = vunpack.c.l.b16 %v399
        %v629 = vunpack.c.l.b16 %v400
        %v630 = vunpack.c.l.b16 %v401
        %v631 = vunpack.c.l.b16 %v402
        %v632 = vunpack.c.l.b16 %v403
        %v633 = vunpack.c.l.b16 %v404
        %v634 = vunpack.c.l.b16 %v405
        %v635 = vunpack.c.l.b16 %v406
        %v636 = vunpack.c.l.b16 %v407
        %v637 = vunpack.c.l.b16 %v408
        %v638 = vunpack.c.l.b16 %v409
        %v639 = vunpack.c.l.b16 %v410
        %v640 = vunpack.c.l.b16 %v411
        %v641 = vunpack.c.l.b16 %v412
        %v642 = vunpack.c.l.b16 %v413
        %v643 = vunpack.c.l.b16 %v414
        %v644 = vunpack.c.l.b16 %v415
        %v645 = vunpack.c.l.b16 %v416
        %v646 = vunpack.c.l.b16 %v417
        %v647 = vunpack.c.l.b16 %v418
        %v648 = vunpack.c.l.b16 %v419
        %v649 = vunpack.c.l.b16 %v420
        %v650 = vunpack.c.l.b16 %v421
        %v651 = vunpack.c.l.b16 %v422
        %v652 = vunpack.c.l.b16 %v423
        %v653 = vunpack.c.l.b16 %v424
        %v654 = vunpack.c.l.b16 %v425
        %v655 = vunpack.c.l.b16 %v426
        %v656 = vpack.c.b16 %v561, %v560
        %v657 = vpack.c.b16 %v563, %v562
        %v658 = vpack.c.b16 %v565, %v564
        %v659 = vpack.c.b16 %v567, %v566
        %v660 = vpack.c.b16 %v569, %v568
        %v661 = vpack.c.b16 %v571, %v570
        %v662 = vpack.c.b16 %v573, %v572
        %v663 = vpack.c.b16 %v575, %v574
        %v664 = vpack.c.b16 %v577, %v576
        %v665 = vpack.c.b16 %v579, %v578
        %v666 = vpack.c.b16 %v581, %v580
        %v667 = vpack.c.b16 %v583, %v582
        %v668 = vpack.c.b16 %v585, %v584
        %v669 = vpack.c.b16 %v587, %v586
        %v670 = vpack.c.b16 %v589, %v588
        %v671 = vpack.c.b16 %v591, %v590
        %v672 = vpack.c.b16 %v593, %v592
        %v673 = vpack.c.b16 %v595, %v594
        %v674 = vpack.c.b16 %v597, %v596
        %v675 = vpack.c.b16 %v599, %v598
        %v676 = vpack.c.b16 %v601, %v600
        %v677 = vpack.c.b16 %v603, %v602
        %v678 = vpack.c.b16 %v605, %v604
        %v679 = vpack.c.b16 %v607, %v606
        %v680 = vpack.c.b16 %v609, %v608
        %v681 = vpack.c.b16 %v611, %v610
        %v682 = vpack.c.b16 %v613, %v612
        %v683 = vpack.c.b16 %v615, %v614
        %v684 = vpack.c.b16 %v617, %v616
        %v685 = vpack.c.b16 %v619, %v618
        %v686 = vpack.c.b16 %v621, %v620
        %v687 = vpack.c.b16 %v623, %v622
        %v688 = vpack.c.b16 %v625, %v624
        %v689 = vpack.c.b16 %v627, %v626
        %v690 = vpack.c.b16 %v629, %v628
        %v691 = vpack.c.b16 %v631, %v630
        %v692 = vpack.c.b16 %v633, %v632
        %v693 = vpack.c.b16 %v635, %v634
        %v694 = vpack.c.b16 %v637, %v636
        %v695 = vpack.c.b16 %v639, %v638
        %v696 = vpack.c.b16 %v641, %v640
        %v697 = vpack.c.b16 %v643, %v642
        %v698 = vpack.c.b16 %v645, %v644
        %v699 = vpack.c.b16 %v647, %v646
        %v700 = vpack.c.b16 %v649, %v648
        %v701 = vpack.c.b16 %v651, %v650
        %v702 = vpack.c.b16 %v653, %v652
        %v703 = vpack.c.b16 %v655, %v654
        %752 = vmatprep.subr.bf16.mxu0 0
        %753 = vmatpush1.bf16.msra.mxu0 %v656
        %754 = vmatprep.subr.bf16.mxu0 0
        %755 = vmatpush1.bf16.msra.mxu0 %v657
        %756 = vmatprep.subr.bf16.mxu0 0
        %757 = vmatpush1.bf16.msra.mxu0 %v658
        %758 = vmatprep.subr.bf16.mxu0 0
        %759 = vmatpush1.bf16.msra.mxu0 %v659
        %760 = vmatprep.subr.bf16.mxu0 0
        %761 = vmatpush1.bf16.msra.mxu0 %v660
        %762 = vmatprep.subr.bf16.mxu0 0
        %763 = vmatpush1.bf16.msra.mxu0 %v661
        %764 = vmatprep.subr.bf16.mxu0 0
        %765 = vmatpush1.bf16.msra.mxu0 %v662
        %766 = vmatprep.subr.bf16.mxu0 0
        %767 = vmatpush1.bf16.msra.mxu0 %v663
        %768 = vmatprep.subr.bf16.mxu0 0
        %769 = vmatpush1.bf16.msra.mxu0 %v664
        %770 = vmatprep.subr.bf16.mxu0 0
        %771 = vmatpush1.bf16.msra.mxu0 %v665
        %772 = vmatprep.subr.bf16.mxu0 0
        %773 = vmatpush1.bf16.msra.mxu0 %v666
        %774 = vmatprep.subr.bf16.mxu0 0
        %775 = vmatpush1.bf16.msra.mxu0 %v667
        %776 = vmatprep.subr.bf16.mxu0 0
        %777 = vmatpush1.bf16.msra.mxu0 %v668
        %778 = vmatprep.subr.bf16.mxu0 0
        %779 = vmatpush1.bf16.msra.mxu0 %v669
        %780 = vmatprep.subr.bf16.mxu0 0
        %781 = vmatpush1.bf16.msra.mxu0 %v670
        %782 = vmatprep.subr.bf16.mxu0 0
        %783 = vmatpush1.bf16.msra.mxu0 %v671
        %784 = vmatprep.mubr.bf16.mxu0 %v453
        %785 = vmatmul.mubr.bf16.gmra.mrb[0].mxu0 %v452
        %v786 = vpop.f32.mrb[0].mxu0
        %v787 = vadd.f32 %v432, %v786
        %v788 = vpop.f32.mrb[0].mxu0
        %v789 = vpop.f32.mrb[0].mxu0
        %v790 = vadd.f32 %v432, %v789
        %v791 = vpop.f32.mrb[0].mxu0
        %792 = vdwg.mxu0
        %793 = vmatprep.subr.bf16.mxu0 0
        %794 = vmatpush1.bf16.msra.mxu0 %v672
        %795 = vmatprep.subr.bf16.mxu0 0
        %796 = vmatpush1.bf16.msra.mxu0 %v673
        %797 = vmatprep.subr.bf16.mxu0 0
        %798 = vmatpush1.bf16.msra.mxu0 %v674
        %799 = vmatprep.subr.bf16.mxu0 0
        %800 = vmatpush1.bf16.msra.mxu0 %v675
        %801 = vmatprep.subr.bf16.mxu0 0
        %802 = vmatpush1.bf16.msra.mxu0 %v676
        %803 = vmatprep.subr.bf16.mxu0 0
        %804 = vmatpush1.bf16.msra.mxu0 %v677
        %805 = vmatprep.subr.bf16.mxu0 0
        %806 = vmatpush1.bf16.msra.mxu0 %v678
        %807 = vmatprep.subr.bf16.mxu0 0
        %808 = vmatpush1.bf16.msra.mxu0 %v679
        %809 = vmatprep.subr.bf16.mxu0 0
        %810 = vmatpush1.bf16.msra.mxu0 %v680
        %811 = vmatprep.subr.bf16.mxu0 0
        %812 = vmatpush1.bf16.msra.mxu0 %v681
        %813 = vmatprep.subr.bf16.mxu0 0
        %814 = vmatpush1.bf16.msra.mxu0 %v682
        %815 = vmatprep.subr.bf16.mxu0 0
        %816 = vmatpush1.bf16.msra.mxu0 %v683
        %817 = vmatprep.subr.bf16.mxu0 0
        %818 = vmatpush1.bf16.msra.mxu0 %v684
        %819 = vmatprep.subr.bf16.mxu0 0
        %820 = vmatpush1.bf16.msra.mxu0 %v685
        %821 = vmatprep.subr.bf16.mxu0 0
        %822 = vmatpush1.bf16.msra.mxu0 %v686
        %823 = vmatprep.subr.bf16.mxu0 0
        %824 = vmatpush1.bf16.msra.mxu0 %v687
        %825 = vmatprep.mubr.bf16.mxu0 %v455
        %826 = vmatmul.mubr.bf16.gmra.mrb[0].mxu0 %v454
        %v827 = vpop.f32.mrb[0].mxu0
        %v828 = vadd.f32 %v787, %v827
        %v829 = vpop.f32.mrb[0].mxu0
        %v830 = vpop.f32.mrb[0].mxu0
        %v831 = vadd.f32 %v790, %v830
        %v832 = vpop.f32.mrb[0].mxu0
        %833 = vdwg.mxu0
        %834 = vmatprep.subr.bf16.mxu0 0
        %835 = vmatpush1.bf16.msra.mxu0 %v688
        %836 = vmatprep.subr.bf16.mxu0 0
        %837 = vmatpush1.bf16.msra.mxu0 %v689
        %838 = vmatprep.subr.bf16.mxu0 0
        %839 = vmatpush1.bf16.msra.mxu0 %v690
        %840 = vmatprep.subr.bf16.mxu0 0
        %841 = vmatpush1.bf16.msra.mxu0 %v691
        %842 = vmatprep.subr.bf16.mxu0 0
        %843 = vmatpush1.bf16.msra.mxu0 %v692
        %844 = vmatprep.subr.bf16.mxu0 0
        %845 = vmatpush1.bf16.msra.mxu0 %v693
        %846 = vmatprep.subr.bf16.mxu0 0
        %847 = vmatpush1.bf16.msra.mxu0 %v694
        %848 = vmatprep.subr.bf16.mxu0 0
        %849 = vmatpush1.bf16.msra.mxu0 %v695
        %850 = vmatprep.subr.bf16.mxu0 0
        %851 = vmatpush1.bf16.msra.mxu0 %v696
        %852 = vmatprep.subr.bf16.mxu0 0
        %853 = vmatpush1.bf16.msra.mxu0 %v697
        %854 = vmatprep.subr.bf16.mxu0 0
        %855 = vmatpush1.bf16.msra.mxu0 %v698
        %856 = vmatprep.subr.bf16.mxu0 0
        %857 = vmatpush1.bf16.msra.mxu0 %v699
        %858 = vmatprep.subr.bf16.mxu0 0
        %859 = vmatpush1.bf16.msra.mxu0 %v700
        %860 = vmatprep.subr.bf16.mxu0 0
        %861 = vmatpush1.bf16.msra.mxu0 %v701
        %862 = vmatprep.subr.bf16.mxu0 0
        %863 = vmatpush1.bf16.msra.mxu0 %v702
        %864 = vmatprep.subr.bf16.mxu0 0
        %865 = vmatpush1.bf16.msra.mxu0 %v703
        %866 = vmatprep.mubr.bf16.mxu0 %v457
        %867 = vmatmul.mubr.bf16.gmra.mrb[0].mxu0 %v456
        %v868 = vpop.f32.mrb[0].mxu0
        %v869 = vadd.f32 %v828, %v868
        %v870 = vpop.f32.mrb[0].mxu0
        %v871 = vpop.f32.mrb[0].mxu0
        %v872 = vadd.f32 %v831, %v871
        %v873 = vpop.f32.mrb[0].mxu0
        %874 = vdwg.mxu0
        %v875 = vlaneseq
        %v876 = vand.u32 %v875, 127
        %vm877 = vcmp.lt.s32.totalorder %v876, 0
        %v878 = vsub.s32 0, %v876
        %v879 = vsel %vm877, %v878, %v876
        %v880 = vshrl.u32 %v879, 3
        %v881 = vand.u32 %v879, 7
        %v882 = vsub.s32 0, %v881
        %v883 = vsel %vm877, %v882, %v881
        %vm884 = vcmp.ne.s32.totalorder %v883, 0
        %vm885 = vcmp.lt.s32.totalorder %v883, 0
        %vm886 = vmand %vm885, %vm884
        %v887 = vadd.s32 %v883, 8
        %v888 = vsel %vm886, %v887, %v883
        %889 = vrot.lane.b32.xlu0 %v869, 127
        %v890 = vpop.permute.xlu0 %889
        %891 = vrot.lane.b32.xlu0 %v872, 127
        %v892 = vpop.permute.xlu0 %891
        %893 = vrot.lane.b32.xlu0 %v869, 7
        %v894 = vpop.permute.xlu0 %893
        %895 = vrot.lane.b32.xlu0 %v872, 7
        %v896 = vpop.permute.xlu0 %895
        %vm897 = vcmp.lt.s32.totalorder %v888, 7
        %v898 = vsel %vm897, 1, 0
        %vm899 = vcmp.eq.s32.totalorder %v898, 1
        %v900 = vsel %vm899, %v890, %v894
        %v901 = vsel %vm899, %v892, %v896
        %v902 = vadd.f32 %v869, %v900
        %v903 = vadd.f32 %v872, %v901
        %904 = vrot.lane.b32.xlu0 %v902, 126
        %v905 = vpop.permute.xlu0 %904
        %906 = vrot.lane.b32.xlu0 %v903, 126
        %v907 = vpop.permute.xlu0 %906
        %908 = vrot.lane.b32.xlu0 %v902, 6
        %v909 = vpop.permute.xlu0 %908
        %910 = vrot.lane.b32.xlu0 %v903, 6
        %v911 = vpop.permute.xlu0 %910
        %vm912 = vcmp.lt.s32.totalorder %v888, 6
        %v913 = vsel %vm912, 1, 0
        %vm914 = vcmp.eq.s32.totalorder %v913, 1
        %v915 = vsel %vm914, %v905, %v909
        %v916 = vsel %vm914, %v907, %v911
        %v917 = vadd.f32 %v902, %v915
        %v918 = vadd.f32 %v903, %v916
        %919 = vrot.lane.b32.xlu0 %v917, 124
        %v920 = vpop.permute.xlu0 %919
        %921 = vrot.lane.b32.xlu0 %v918, 124
        %v922 = vpop.permute.xlu0 %921
        %923 = vrot.lane.b32.xlu0 %v917, 4
        %v924 = vpop.permute.xlu0 %923
        %925 = vrot.lane.b32.xlu0 %v918, 4
        %v926 = vpop.permute.xlu0 %925
        %vm927 = vcmp.lt.s32.totalorder %v888, 4
        %v928 = vsel %vm927, 1, 0
        %vm929 = vcmp.eq.s32.totalorder %v928, 1
        %v930 = vsel %vm929, %v920, %v924
        %v931 = vsel %vm929, %v922, %v926
        %v932 = vadd.f32 %v917, %v930
        %v933 = vadd.f32 %v918, %v931
        %v934 = vmul.f32 %v932, 0.125
        %v935 = vmul.f32 %v933, 0.125
        %v936 = vsub.f32 %v869, %v934
        %v937 = vsub.f32 %v872, %v935
        %v938 = vmul.f32 %v936, %v936
        %v939 = vmul.f32 %v937, %v937
        %940 = vrot.lane.b32.xlu0 %v938, 127
        %v941 = vpop.permute.xlu0 %940
        %942 = vrot.lane.b32.xlu0 %v939, 127
        %v943 = vpop.permute.xlu0 %942
        %944 = vrot.lane.b32.xlu0 %v938, 7
        %v945 = vpop.permute.xlu0 %944
        %946 = vrot.lane.b32.xlu0 %v939, 7
        %v947 = vpop.permute.xlu0 %946
        %v948 = vsel %vm899, %v941, %v945
        %v949 = vsel %vm899, %v943, %v947
        %v950 = vadd.f32 %v938, %v948
        %v951 = vadd.f32 %v939, %v949
        %952 = vrot.lane.b32.xlu0 %v950, 126
        %v953 = vpop.permute.xlu0 %952
        %954 = vrot.lane.b32.xlu0 %v951, 126
        %v955 = vpop.permute.xlu0 %954
        %956 = vrot.lane.b32.xlu0 %v950, 6
        %v957 = vpop.permute.xlu0 %956
        %958 = vrot.lane.b32.xlu0 %v951, 6
        %v959 = vpop.permute.xlu0 %958
        %v960 = vsel %vm914, %v953, %v957
        %v961 = vsel %vm914, %v955, %v959
        %v962 = vadd.f32 %v950, %v960
        %v963 = vadd.f32 %v951, %v961
        %964 = vrot.lane.b32.xlu0 %v962, 124
        %v965 = vpop.permute.xlu0 %964
        %966 = vrot.lane.b32.xlu0 %v963, 124
        %v967 = vpop.permute.xlu0 %966
        %968 = vrot.lane.b32.xlu0 %v962, 4
        %v969 = vpop.permute.xlu0 %968
        %970 = vrot.lane.b32.xlu0 %v963, 4
        %v971 = vpop.permute.xlu0 %970
        %v972 = vsel %vm929, %v965, %v969
        %v973 = vsel %vm929, %v967, %v971
        %v974 = vadd.f32 %v962, %v972
        %v975 = vadd.f32 %v963, %v973
        %v976 = vmul.f32 %v974, 0.125
        %v977 = vmul.f32 %v975, 0.125
        %v978 = vadd.f32 %v976, 1e-06
        %v979 = vadd.f32 %v977, 1e-06
        %v980 = vrsqrt.pop %v978
        %v981 = vrsqrt.pop %v979
        %v982 = vmul.f32 %v936, %v980
        %v983 = vmul.f32 %v937, %v981
        %v984 = vld [vmem:[%s4] sm:$0x1]
        %v986 = vlaneseq
        %v987 = vshrl.u32 %v986, 7
        %v988 = vsub.s32 0, %v987
        %v989 = vrot.slane %v984, %v988
        %v991 = vmul.f32 %v982, %v989
        %v992 = vmul.f32 %v983, %v989
        %v993 = vld [vmem:[%s5] sm:$0x1]
        %v995 = vlaneseq
        %v996 = vshrl.u32 %v995, 7
        %v997 = vsub.s32 0, %v996
        %v998 = vrot.slane %v993, %v997
        %v1000 = vadd.f32 %v991, %v998
        %v1001 = vadd.f32 %v992, %v998
        %v1002 = vld [vmem:[%s286] sm:$0xff]
        %v1003 = vld [vmem:[%s286 + $0x8] sm:$0xff]
        %v1004 = vsub.f32 1.0, %v1002
        %v1005 = vsub.f32 1.0, %v1003
        %v1006 = vmul.f32 %v1000, %v1004
        %v1007 = vmul.f32 %v1001, %v1005
        %1008 = vst [vmem:[%s323] sm:$0xff] %v1006
        %1009 = vst [vmem:[%s323 + $0x8] sm:$0xff] %v1007
        %s1010 = sand.u32 %s170, 1
        %s1011 = scalar_lea.sflag [#allocation4], %s1010
        %s1012 = sand.u32 %s170, 1
        %s1013 = smul.addr %s1012, 16
        %s1014 = scalar_lea.vmem [#allocation8], %s1013
        // Predicated region
        $region57: #{tpu_custom_call.1} parent=43 // pred_check
          %p1015 = pneg %p180
        $region58: #{tpu_custom_call.1} parent=43 // pred_check_branch
          %1017 = sbr.rel (%p1015) target = $region60
        $region59: #{tpu_custom_call.1} parent=43 // pred_region
          %s1019 = ssub.s32 256, 256
          %1020 = vsyncadd %s1011, %s1019
          %s1021 = smul.addr %s26, 2
          %s1022 = smul.addr %s1021, 128
          %s1023 = scalar_lea.hbm %s6, %s1022
          %s1024 = sshll.u32 %s1014, 4
          %s1025 = int_to_ptr.vmem [resolvable:$true] %s1024
          %1030 = dma.vmem_to_hbm [thread:$0]  %s1025, 256, %s1023, %s1011, 128, 128, 8
        $region60: #{tpu_custom_call.1} parent=43 // pred_fallthru
          _
      $region44: #{tpu_custom_call.1} parent=5 // pred_fallthru
        _
      %p1031 = scmp.le.s32.totalorder 2, %s21
      // Predicated region
      $region61: #{tpu_custom_call.1} parent=5 // pred_check
        %p1032 = pneg %p1031
      $region62: #{tpu_custom_call.1} parent=5 // pred_check_branch
        %1034 = sbr.rel (%p1032) target = $region64
      $region63: #{tpu_custom_call.1} parent=5 // pred_region
        %s1035 = ssub.s32 %s21, 2
        // Predicated region
        $region65: #{tpu_custom_call.1} parent=63 // pred_check
          %p1036 = pneg %p186
        $region66: #{tpu_custom_call.1} parent=63 // pred_check_branch
          %1038 = sbr.rel (%p1036) target = $region68
        $region67: #{tpu_custom_call.1} parent=63 // pred_region
          %s1039 = sand.u32 %s171, 1
          %s1040 = scalar_lea.sflag [#allocation4], %s1039
          %s1041 = sand.u32 %s171, 1
          %s1042 = smul.addr %s1041, 16
          %s1043 = scalar_lea.vmem [#allocation8], %s1042
          %1044 = dma.done %s1040, 256
        $region68: #{tpu_custom_call.1} parent=63 // pred_fallthru
          _
      $region64: #{tpu_custom_call.1} parent=5 // pred_fallthru
        _
    $region6: #{tpu_custom_call.1} parent=1 // loop_footer
      %s25 = sadd.s32 1, %s21
    $region7: #{tpu_custom_call.1} parent=1 // loop_footer_branch
      %20 = sbr.rel target = $region3
    $region8: #{tpu_custom_call.1} parent=1 // loop_exit
      _
    %1045 = vsyncpa [#allocation3], 1
    %s1046 = scalar_lea.sflag [#allocation3], 1
    %1047 = vsyncpa %s1046, 1
    %1048 = vsyncpa [#allocation6], 1
    %s1049 = scalar_lea.sflag [#allocation6], 1
    %1050 = vsyncpa %s1049, 1
    %1051 = vsyncpa [#allocation4], 1
    %s1052 = scalar_lea.sflag [#allocation4], 1
    %1053 = vsyncpa %s1052, 1

</llo_original>
